<compile_context>
chip_gen: v6e
topology: v6e:2x2x1
jax: 0.10.0
libtpu: 0.0.40
codegen_flags: <defaults>
</compile_context>

<pallas_src>
import functools

import jax
import jax.numpy as jnp
from jax.experimental import pallas as pl
from jax.experimental.pallas import tpu as pltpu


def _kd_loss_kernel(x_ref, t_ref, o_ref, *, inv_temp, batch, tile_b, mask_rows):
    i = pl.program_id(0)

    x = x_ref[...].astype(jnp.float32) * inv_temp
    t = t_ref[...].astype(jnp.float32) * inv_temp

    # Stable log-softmax pieces for the student (input) logits.
    x_max = jnp.max(x, axis=-1, keepdims=True)
    xs = x - x_max
    lse_x = jnp.log(jnp.sum(jnp.exp(xs), axis=-1, keepdims=True))

    # Stable softmax pieces for the teacher (target) logits.
    t_max = jnp.max(t, axis=-1, keepdims=True)
    ts = t - t_max
    e_t = jnp.exp(ts)
    denom = jnp.sum(e_t, axis=-1, keepdims=True)

    # Per-row KL:  sum_j q*(log q - log p)
    #            = (sum_j e_t*(ts - xs)) / denom + lse_x - log(denom)
    num = jnp.sum(e_t * (ts - xs), axis=-1, keepdims=True)
    row_loss = num / denom + lse_x - jnp.log(denom)          # (tile_b, 1)

    if mask_rows:
        # Last partial tile: rows past the true batch size contain garbage
        # (NOT zeros) -- mask them out explicitly.
        row_ids = jax.lax.broadcasted_iota(jnp.int32, row_loss.shape, 0) + i * tile_b
        row_loss = jnp.where(row_ids < batch, row_loss, 0.0)

    # One lane-dense write per tile: this tile's partial sum broadcast to (8,128).
    tile_sum = jnp.sum(row_loss)
    o_ref[...] = jnp.broadcast_to(tile_sum, o_ref.shape).astype(jnp.float32)


def _vmem_capacity_bytes():
    try:
        info = pltpu.get_tpu_info()
        cap = getattr(info, "vmem_capacity_bytes", None)
        if cap:
            return int(cap)
    except Exception:
        pass
    return 64 * 1024 * 1024  # conservative fallback (v7x per-TC VMEM)


def _pick_tile_b(C, itemsize, vmem_cap, buffer_count):
    # Resident bytes per batch row:
    #   2 inputs x buffer_count pipeline buffers x itemsize + ~6 f32 temporaries
    per_row = C * (2 * buffer_count * itemsize + 6 * 4)
    budget = int(vmem_cap * 0.40)
    tile_b = budget // max(per_row, 1)
    tile_b = min(512, tile_b)               # ~85% of HBM roofline already; v7x-safe
    tile_b = max(8, (tile_b // 8) * 8)
    return tile_b


def kd_loss(inp, tgt, temp_factor, *, tile_b=None, buffer_count=2):
    """Pallas TPU implementation of KDLoss.forward. Returns a scalar f32.

    Inputs are ingested in their given dtype (pass bf16 only if the logits
    already live in bf16); all in-kernel math is f32.
    """
    assert inp.shape == tgt.shape and inp.ndim == 2, "expect (batch, classes) logits"
    B, C = inp.shape
    inv_temp = float(1.0 / temp_factor)
    scale = float(temp_factor) ** 2 / float(B)

    itemsize = jnp.dtype(inp.dtype).itemsize
    vmem_cap = _vmem_capacity_bytes()
    if tile_b is None:
        tile_b = _pick_tile_b(C, itemsize, vmem_cap, buffer_count)
    tile_b = int(tile_b)
    if tile_b >= B:
        tile_b = B                    # single full block; no masking needed
    else:
        tile_b = max(8, (tile_b // 8) * 8)

    n_tiles = pl.cdiv(B, tile_b)
    mask_rows = (n_tiles * tile_b != B)   # only the last tile overhangs B

    pipeline_bytes = 2 * buffer_count * tile_b * C * itemsize
    temp_bytes = 6 * tile_b * C * 4
    vmem_limit = max(32 << 20, pipeline_bytes + temp_bytes + (4 << 20))
    vmem_limit = min(vmem_limit, int(vmem_cap * 0.8))

    spec_kwargs = {}
    if buffer_count != 2:
        # v7x option: spend spare VMEM on deeper pipelining to hide DMA jitter.
        spec_kwargs["pipeline_mode"] = pl.Buffered(buffer_count)
    in_spec = pl.BlockSpec((tile_b, C), lambda i: (i, 0), **spec_kwargs)

    kernel = functools.partial(
        _kd_loss_kernel,
        inv_temp=inv_temp,
        batch=B,
        tile_b=tile_b,
        mask_rows=mask_rows,
    )

    cost = pl.CostEstimate(
        flops=8 * B * C,
        transcendentals=2 * B * C,
        bytes_accessed=2 * B * C * itemsize + n_tiles * 8 * 128 * 4,
    )

    out = pl.pallas_call(
        kernel,
        out_shape=jax.ShapeDtypeStruct((n_tiles, 8, 128), jnp.float32),
        grid_spec=pltpu.PrefetchScalarGridSpec(
            num_scalar_prefetch=0,
            grid=(n_tiles,),
            in_specs=[in_spec, in_spec],
            out_specs=pl.BlockSpec((1, 8, 128), lambda i: (i, 0, 0)),
        ),
        compiler_params=pltpu.CompilerParams(
            dimension_semantics=("parallel",),
            vmem_limit_bytes=int(vmem_limit),
        ),
        cost_estimate=cost,
    )(inp, tgt)

    # Tiny final reduction over per-tile partial sums + T^2/B scaling.
    return jnp.sum(out[:, 0, 0]) * scale


def _kd_loss_ref(inp, tgt, temp_factor):
    log_p = jax.nn.log_softmax(inp / temp_factor, axis=1)
    q = jax.nn.softmax(tgt / temp_factor, axis=1)
    return jnp.sum(q * (jnp.log(q) - log_p)) * temp_factor ** 2 / inp.shape[0]


if __name__ == "__main__":
    temp_factor = 4.0
    B, C = 20, 128   # non-multiple-of-8 batch; C=128 is lane-dense

    key = jax.random.PRNGKey(0)
    k1, k2 = jax.random.split(key)
    student_logits = jax.random.normal(k1, (B, C), dtype=jnp.float32)
    teacher_logits = jax.random.normal(k2, (B, C), dtype=jnp.float32)

    ref = _kd_loss_ref(student_logits, teacher_logits, temp_factor)

    # Auto (VMEM-sized) tiling: tile_b >= B, so a single full block, no masking.
    loss_auto = kd_loss(student_logits, teacher_logits, temp_factor)
    loss_auto = jax.block_until_ready(loss_auto)
    assert jnp.allclose(loss_auto, ref, rtol=1e-4, atol=1e-4), (loss_auto, ref)

    # Forced small tile: exercises the flattened parallel grid, per-tile
    # partial-sum outputs, and the in-kernel row masking of the ragged tail.
    loss_tiled = kd_loss(student_logits, teacher_logits, temp_factor, tile_b=8)
    loss_tiled = jax.block_until_ready(loss_tiled)
    assert jnp.allclose(loss_tiled, ref, rtol=1e-4, atol=1e-4), (loss_tiled, ref)

    print("KERNEL_OK")
</pallas_src>

<mosaic_0001>
module attributes {stable_mosaic.version = 11 : i64} {
  func.func @_kd_loss_kernel(%arg0: i32, %arg1: memref<20x128xf32, #tpu.memory_space<vmem>>, %arg2: memref<20x128xf32, #tpu.memory_space<vmem>>, %arg3: memref<1x8x128xf32, #tpu.memory_space<vmem>>) attributes {dimension_semantics = [#tpu.dimension_semantics<parallel>], iteration_bounds = array<i64: 1>, scalar_prefetch = 0 : i64, scratch_operands = 0 : i64, tpu.core_type = #tpu.core_type<tc>, window_params = [{transform_indices = @transform_0, window_bounds = array<i64: 20, 128>}, {transform_indices = @transform_1, window_bounds = array<i64: 20, 128>}, {transform_indices = @transform_2, window_bounds = array<i64: 1, 8, 128>}]} {
    %c0 = arith.constant 0 : index
    %c0_0 = arith.constant 0 : index
    %0 = vector.load %arg1[%c0, %c0_0] : memref<20x128xf32, #tpu.memory_space<vmem>>, vector<20x128xf32>
    %cst = arith.constant 2.500000e-01 : f32
    %1 = vector.broadcast %cst : f32 to vector<20x128xf32>
    %2 = arith.mulf %0, %1 : vector<20x128xf32>
    %c0_1 = arith.constant 0 : index
    %c0_2 = arith.constant 0 : index
    %3 = vector.load %arg2[%c0_1, %c0_2] : memref<20x128xf32, #tpu.memory_space<vmem>>, vector<20x128xf32>
    %cst_3 = arith.constant 2.500000e-01 : f32
    %4 = vector.broadcast %cst_3 : f32 to vector<20x128xf32>
    %5 = arith.mulf %3, %4 : vector<20x128xf32>
    %cst_4 = arith.constant dense<0xFF800000> : vector<20xf32>
    %6 = vector.multi_reduction <maximumf>, %2, %cst_4 [1] : vector<20x128xf32> to vector<20xf32>
    %7 = vector.shape_cast %6 : vector<20xf32> to vector<20x1xf32>
    %8 = vector.broadcast %7 : vector<20x1xf32> to vector<20x128xf32>
    %9 = arith.subf %2, %8 : vector<20x128xf32>
    %10 = math.exp %9 : vector<20x128xf32>
    %cst_5 = arith.constant dense<0.000000e+00> : vector<20xf32>
    %11 = vector.multi_reduction <add>, %10, %cst_5 [1] : vector<20x128xf32> to vector<20xf32>
    %12 = vector.shape_cast %11 : vector<20xf32> to vector<20x1xf32>
    %13 = math.log %12 : vector<20x1xf32>
    %cst_6 = arith.constant dense<0xFF800000> : vector<20xf32>
    %14 = vector.multi_reduction <maximumf>, %5, %cst_6 [1] : vector<20x128xf32> to vector<20xf32>
    %15 = vector.shape_cast %14 : vector<20xf32> to vector<20x1xf32>
    %16 = vector.broadcast %15 : vector<20x1xf32> to vector<20x128xf32>
    %17 = arith.subf %5, %16 : vector<20x128xf32>
    %18 = math.exp %17 : vector<20x128xf32>
    %cst_7 = arith.constant dense<0.000000e+00> : vector<20xf32>
    %19 = vector.multi_reduction <add>, %18, %cst_7 [1] : vector<20x128xf32> to vector<20xf32>
    %20 = vector.shape_cast %19 : vector<20xf32> to vector<20x1xf32>
    %21 = arith.subf %17, %9 : vector<20x128xf32>
    %22 = arith.mulf %18, %21 : vector<20x128xf32>
    %cst_8 = arith.constant dense<0.000000e+00> : vector<20xf32>
    %23 = vector.multi_reduction <add>, %22, %cst_8 [1] : vector<20x128xf32> to vector<20xf32>
    %24 = vector.shape_cast %23 : vector<20xf32> to vector<20x1xf32>
    %25 = arith.divf %24, %20 : vector<20x1xf32>
    %26 = arith.addf %25, %13 : vector<20x1xf32>
    %27 = math.log %20 : vector<20x1xf32>
    %28 = arith.subf %26, %27 : vector<20x1xf32>
    %29 = vector.shape_cast %28 : vector<20x1xf32> to vector<1x20x1xf32>
    %cst_9 = arith.constant dense<0.000000e+00> : vector<1xf32>
    %30 = vector.multi_reduction <add>, %29, %cst_9 [1, 2] : vector<1x20x1xf32> to vector<1xf32>
    %31 = vector.shape_cast %30 : vector<1xf32> to vector<1x1x1xf32>
    %32 = vector.extract %31[0, 0, 0] : f32 from vector<1x1x1xf32>
    %33 = vector.broadcast %32 : f32 to vector<1x8x128xf32>
    %c0_10 = arith.constant 0 : index
    %c0_11 = arith.constant 0 : index
    %c0_12 = arith.constant 0 : index
    %34 = vector.load %arg3[%c0_10, %c0_11, %c0_12] : memref<1x8x128xf32, #tpu.memory_space<vmem>>, vector<1x8x128xf32>
    tpu.vector_store %arg3[%c0_10, %c0_11, %c0_12], %33 {strides = array<i32>} : memref<1x8x128xf32, #tpu.memory_space<vmem>>, vector<1x8x128xf32>,
    return
  }
  func.func @transform_0(%arg0: i32) -> (i32, i32) {
    %c0_i32 = arith.constant 0 : i32
    %c0_i32_0 = arith.constant 0 : i32
    return %arg0, %c0_i32 : i32, i32
  }
  func.func @transform_1(%arg0: i32) -> (i32, i32) {
    %c0_i32 = arith.constant 0 : i32
    %c0_i32_0 = arith.constant 0 : i32
    return %arg0, %c0_i32 : i32, i32
  }
  func.func @transform_2(%arg0: i32) -> (i32, i32, i32) {
    %c0_i32 = arith.constant 0 : i32
    %c0_i32_0 = arith.constant 0 : i32
    %c0_i32_1 = arith.constant 0 : i32
    return %arg0, %c0_i32, %c0_i32_0 : i32, i32, i32
  }
}

</mosaic_0001>

<llo_original>
// kernel: tpu_custom_call.1
$region0: #{tpu_custom_call.1}
  #allocation0 [shape = 'u32[]', space=smem, size = 0x4, offset = 0x4, fixed_abs, tag = 'smem constant byte address 0x4 - core index']
  #allocation1 [shape = 'u32[144,128]{1,0:T(1,128)}', space=vmem, size = 0x12000, scoped, tag = 'internal scratch']
  %s0 = inlined_call_operand.hbm [shape: f32[20,128], index: 0, kind: input, shape index: {}]
  %s1 = inlined_call_operand.hbm [shape: f32[20,128], index: 1, kind: input, shape index: {}]
  %s2 = inlined_call_operand.hbm [shape: f32[1,8,128], index: 2, kind: output, shape index: {}]
  %s3 = sld [smem:[#allocation0]]
  $region26: #{tpu_custom_call.1} parent=0
    _
  %s5 = ssub.s32 1, %s3
  %s6 = scalar_select 0, %s5, %s3
  $region1: #{tpu_custom_call.1} parent=0
    #allocation2 [shape = 'u8[12288]{0}', space=vmem, size = 0x3000, scoped, tag = 'input window, operand 0, single buffered']
    #allocation3 [shape = 's32[1]{0}', space=sflag, size = 0x4, scoped, tag = 'scoped memory for tpu_custom_call.1']
    #allocation4 [shape = 's32[1]{0}', space=sflag, size = 0x4, scoped, tag = 'scoped memory for tpu_custom_call.1']
    #allocation5 [shape = 'u8[12288]{0}', space=vmem, size = 0x3000, scoped, tag = 'input window, operand 1, single buffered']
    #allocation6 [shape = 's32[1]{0}', space=sflag, size = 0x4, scoped, tag = 'scoped memory for tpu_custom_call.1']
    #allocation7 [shape = 'u8[4096]{0}', space=vmem, size = 0x1000, scoped, tag = 'output window, operand 0, single buffered']
    %7 = vsyncpa [#allocation3], 0
    %8 = vsyncpa [#allocation6], 0
    %9 = vsyncpa [#allocation4], 0
    // Predicated region
    $region2: #{tpu_custom_call.1} parent=1 // pred_check
      _
    $region3: #{tpu_custom_call.1} parent=1 // pred_check_branch
      %11 = sbr.rel (0) target = $region5
    $region4: #{tpu_custom_call.1} parent=1 // pred_region
      %s13 = ssub.s32 384, 384
      %14 = vsyncadd [#allocation3], %s13
      %s15 = sshll.u32 [#allocation2], 4
      %s16 = int_to_ptr.vmem [resolvable:$true] %s15
      %21 = dma.hbm_to_vmem [thread:$0]  %s0, 384, %s16, [#allocation3], 128, 128, 8
    $region5: #{tpu_custom_call.1} parent=1 // pred_fallthru
      _
    // Predicated region
    $region6: #{tpu_custom_call.1} parent=1 // pred_check
      _
    $region7: #{tpu_custom_call.1} parent=1 // pred_check_branch
      %23 = sbr.rel (0) target = $region9
    $region8: #{tpu_custom_call.1} parent=1 // pred_region
      %s25 = ssub.s32 384, 384
      %26 = vsyncadd [#allocation6], %s25
      %s27 = sshll.u32 [#allocation5], 4
      %s28 = int_to_ptr.vmem [resolvable:$true] %s27
      %33 = dma.hbm_to_vmem [thread:$0]  %s1, 384, %s28, [#allocation6], 128, 128, 8
    $region9: #{tpu_custom_call.1} parent=1 // pred_fallthru
      _
    // Predicated region
    $region10: #{tpu_custom_call.1} parent=1 // pred_check
      _
    $region11: #{tpu_custom_call.1} parent=1 // pred_check_branch
      %35 = sbr.rel (0) target = $region13
    $region12: #{tpu_custom_call.1} parent=1 // pred_region
      %36 = dma.done [#allocation3], 384
    $region13: #{tpu_custom_call.1} parent=1 // pred_fallthru
      _
    // Predicated region
    $region14: #{tpu_custom_call.1} parent=1 // pred_check
      _
    $region15: #{tpu_custom_call.1} parent=1 // pred_check_branch
      %38 = sbr.rel (0) target = $region17
    $region16: #{tpu_custom_call.1} parent=1 // pred_region
      %39 = dma.done [#allocation6], 384
    $region17: #{tpu_custom_call.1} parent=1 // pred_fallthru
      _
    %v40 = vld [vmem:[#allocation2] sm:$0xff]
    %v41 = vld [vmem:[#allocation2 + $0x8] sm:$0xff]
    %v42 = vld [vmem:[#allocation2 + $0x10] sm:$0xf]
    %v43 = vmul.f32 %v40, 0.25
    %v44 = vmul.f32 %v41, 0.25
    %v45 = vmul.f32 %v42, 0.25
    %v46 = vld [vmem:[#allocation5] sm:$0xff]
    %v47 = vld [vmem:[#allocation5 + $0x8] sm:$0xff]
    %v48 = vld [vmem:[#allocation5 + $0x10] sm:$0xf]
    %v49 = vmul.f32 %v46, 0.25
    %v50 = vmul.f32 %v47, 0.25
    %v51 = vmul.f32 %v48, 0.25
    %52 = vmax.xlane.f32.xlu0 %v43
    %v53 = vpop.xlane.xlu0 %52
    %54 = vmax.xlane.f32.xlu0 %v44
    %v55 = vpop.xlane.xlu0 %54
    %vm56 = vcmask 1043456
    %v57 = vsel %vm56, %v45, -inf
    %58 = vmax.xlane.f32.xlu0 %v57
    %v59 = vpop.xlane.xlu0 %58
    %v60 = vsub.f32 %v43, %v53
    %v61 = vsub.f32 %v44, %v55
    %v62 = vsub.f32 %v45, %v59
    %v63 = vmul.f32 %v60, 1.442695
    %v64 = vpow.pop %v63
    %v65 = vmul.f32 %v61, 1.442695
    %v66 = vpow.pop %v65
    %v67 = vmul.f32 %v62, 1.442695
    %v68 = vpow.pop %v67
    %69 = vadd.xlane.f32.xlu0 %v64
    %v70 = vpop.xlane.xlu0 %69
    %71 = vadd.xlane.f32.xlu0 %v66
    %v72 = vpop.xlane.xlu0 %71
    %v73 = vsel %vm56, %v68, 0.0
    %74 = vadd.xlane.f32.xlu0 %v73
    %v75 = vpop.xlane.xlu0 %74
    %v76 = vlog2.pop %v70
    %v77 = vmul.f32 %v76, 0.6931472
    %v78 = vlog2.pop %v72
    %v79 = vmul.f32 %v78, 0.6931472
    %v80 = vlog2.pop %v75
    %v81 = vmul.f32 %v80, 0.6931472
    %82 = vmax.xlane.f32.xlu0 %v49
    %v83 = vpop.xlane.xlu0 %82
    %84 = vmax.xlane.f32.xlu0 %v50
    %v85 = vpop.xlane.xlu0 %84
    %v86 = vsel %vm56, %v51, -inf
    %87 = vmax.xlane.f32.xlu0 %v86
    %v88 = vpop.xlane.xlu0 %87
    %v89 = vsub.f32 %v49, %v83
    %v90 = vsub.f32 %v50, %v85
    %v91 = vsub.f32 %v51, %v88
    %v92 = vmul.f32 %v89, 1.442695
    %v93 = vpow.pop %v92
    %v94 = vmul.f32 %v90, 1.442695
    %v95 = vpow.pop %v94
    %v96 = vmul.f32 %v91, 1.442695
    %v97 = vpow.pop %v96
    %98 = vadd.xlane.f32.xlu0 %v93
    %v99 = vpop.xlane.xlu0 %98
    %100 = vadd.xlane.f32.xlu0 %v95
    %v101 = vpop.xlane.xlu0 %100
    %v102 = vsel %vm56, %v97, 0.0
    %103 = vadd.xlane.f32.xlu0 %v102
    %v104 = vpop.xlane.xlu0 %103
    %v105 = vsub.f32 %v89, %v60
    %v106 = vsub.f32 %v90, %v61
    %v107 = vsub.f32 %v91, %v62
    %v108 = vmul.f32 %v93, %v105
    %v109 = vmul.f32 %v95, %v106
    %v110 = vmul.f32 %v97, %v107
    %111 = vadd.xlane.f32.xlu0 %v108
    %v112 = vpop.xlane.xlu0 %111
    %113 = vadd.xlane.f32.xlu0 %v109
    %v114 = vpop.xlane.xlu0 %113
    %v115 = vsel %vm56, %v110, 0.0
    %116 = vadd.xlane.f32.xlu0 %v115
    %v117 = vpop.xlane.xlu0 %116
    %v118 = vrcp.pop %v99
    %v119 = vmul.f32 %v112, %v118
    %v120 = vrcp.pop %v101
    %v121 = vmul.f32 %v114, %v120
    %v122 = vrcp.pop %v104
    %v123 = vmul.f32 %v117, %v122
    %v124 = vadd.f32 %v119, %v77
    %v125 = vadd.f32 %v121, %v79
    %v126 = vadd.f32 %v123, %v81
    %v127 = vlog2.pop %v99
    %v128 = vmul.f32 %v127, 0.6931472
    %v129 = vlog2.pop %v101
    %v130 = vmul.f32 %v129, 0.6931472
    %v131 = vlog2.pop %v104
    %v132 = vmul.f32 %v131, 0.6931472
    %v133 = vsub.f32 %v124, %v128
    %v134 = vsub.f32 %v125, %v130
    %v135 = vsub.f32 %v126, %v132
    %vm136 = vcmask 7168
    %v137 = vsel %vm136, %v133, 0.0
    %v138 = vsel %vm136, %v134, 0.0
    %v139 = vadd.f32 %v137, %v138
    %vm140 = vcmask 3072
    %v141 = vsel %vm140, %v135, 0.0
    %v142 = vadd.f32 %v139, %v141
    %143 = vadd.xlane.f32.xlu0 %v142
    %v144 = vpop.xlane.xlu0 %143
    %v145 = vrot.slane %v144, 4
    %v146 = vadd.f32 %v144, %v145
    %v147 = vrot.slane %v146, 2
    %v148 = vadd.f32 %v146, %v147
    %v149 = vrot.slane %v148, 1
    %v150 = vadd.f32 %v148, %v149
    %s151 = vtos %v150
    %v152 = vstv %s151
    %153 = vst [vmem:[#allocation7] sm:$0xff] %v152
    // Predicated region
    $region18: #{tpu_custom_call.1} parent=1 // pred_check
      _
    $region19: #{tpu_custom_call.1} parent=1 // pred_check_branch
      %155 = sbr.rel (0) target = $region21
    $region20: #{tpu_custom_call.1} parent=1 // pred_region
      %s157 = ssub.s32 128, 128
      %158 = vsyncadd [#allocation4], %s157
      %s160 = sshll.u32 [#allocation7], 4
      %s161 = int_to_ptr.vmem [resolvable:$true] %s160
      %163 = dma.vmem_to_hbm [thread:$0]  %s161, 128, %s2, [#allocation4]
    $region21: #{tpu_custom_call.1} parent=1 // pred_fallthru
      _
    // Predicated region
    $region22: #{tpu_custom_call.1} parent=1 // pred_check
      _
    $region23: #{tpu_custom_call.1} parent=1 // pred_check_branch
      %165 = sbr.rel (0) target = $region25
    $region24: #{tpu_custom_call.1} parent=1 // pred_region
      %166 = dma.done [#allocation4], 128
    $region25: #{tpu_custom_call.1} parent=1 // pred_fallthru
      _
    %167 = vsyncpa [#allocation3], 1
    %168 = vsyncpa [#allocation6], 1
    %169 = vsyncpa [#allocation4], 1

</llo_original>
